<compile_context>
chip_gen: v7x
topology: tpu7x:2x2x1
jax: 0.10.0
libtpu: 0.0.40
codegen_flags: <defaults>
</compile_context>

<pallas_src>
import math

import jax
import jax.numpy as jnp
from jax import lax
from jax.experimental import pallas as pl
from jax.experimental.pallas import tpu as pltpu

_CHUNK_ROWS = 8          # key rows of the Nr tile processed per inner-loop step
_MAX_TILE_NR = 512
_MAX_TILE_NA = 512


def _round_up(x, m):
    return ((x + m - 1) // m) * m


def _compute_dtype():
    """bf16 inner math on chips with bf16 VPU/EUP (v6e / v7x); f32 otherwise."""
    try:
        kind = jax.devices()[0].device_kind.lower()
    except Exception:
        return jnp.float32
    if any(tag in kind for tag in ("v6", "v7", "7x")):
        return jnp.bfloat16
    return jnp.float32


def _make_kernel(compute_dtype, t_nr):
    n_chunks = t_nr // _CHUNK_ROWS
    unroll = max(1, min(n_chunks, 4))

    def kernel(recv_ref, attd_ref, wk_ref, wq_ref, bias_ref, a_ref,
               out_ref, keysb_sc):
        # recv (1, t_nr, F) | attd (1, t_na, F) | wk/wq (F, Dp) | bias (1, Dp)
        # a (Dp, 1) | out (1, t_nr, t_na) | keysb_sc VMEM scratch (t_nr, Dp).

        # keys + bias: once per (b, i) tile, carried across the j sweep
        # (j axis is "arbitrary", so the scratch legally persists).
        @pl.when(pl.program_id(2) == 0)
        def _():
            keysb_sc[...] = (
                jnp.dot(recv_ref[0], wk_ref[...],
                        preferred_element_type=jnp.float32)
                + bias_ref[...])                                # (t_nr, Dp) f32

        # queries for this (b, j) tile; transpose once so Na sits on lanes.
        q = jnp.dot(attd_ref[0], wq_ref[...],
                    preferred_element_type=jnp.float32)         # (t_na, Dp)
        q_b = q.T.astype(compute_dtype)[None, :, :]             # (1, Dp, t_na)
        a_b = a_ref[...][None, :, :]                            # (1, Dp, 1) f32

        def body(c, carry):
            r0 = pl.multiple_of(c * _CHUNK_ROWS, _CHUNK_ROWS)
            kb = keysb_sc[pl.ds(r0, _CHUNK_ROWS), :].astype(compute_dtype)
            e = kb[:, :, None] + q_b                            # (R, Dp, t_na)
            t = jnp.tanh(e)                                     # EUP, lane-dense
            s = jnp.sum(t * a_b, axis=1)                        # f32 (R, t_na)
            out_ref[0, pl.ds(r0, _CHUNK_ROWS), :] = s.astype(out_ref.dtype)
            return carry

        lax.fori_loop(0, n_chunks, body, 0, unroll=unroll)

    return kernel


def co_attention(receiver, attendant, w_k, w_q, bias, a):
    """Pallas implementation of CoAttentionLayer.forward."""
    B, Nr, F = receiver.shape
    _, Na, _ = attendant.shape
    D = w_k.shape[1]
    f32 = jnp.float32
    cdt = _compute_dtype()

    # Granule padding only (Nr -> 8, Na -> 128, D -> 8); tiles clamp to 512.
    nr_p = _round_up(Nr, _CHUNK_ROWS)
    na_p = _round_up(Na, 128)
    d_p = _round_up(D, 8)
    t_nr = min(_MAX_TILE_NR, nr_p)
    t_na = min(_MAX_TILE_NA, na_p)

    recv_in = receiver.astype(f32)
    if nr_p != Nr:
        recv_in = jnp.zeros((B, nr_p, F), f32).at[:, :Nr, :].set(recv_in)
    attd_in = attendant.astype(f32)
    if na_p != Na:
        attd_in = jnp.zeros((B, na_p, F), f32).at[:, :Na, :].set(attd_in)

    wk_in = w_k.astype(f32)
    wq_in = w_q.astype(f32)
    bias_in = bias.astype(f32).reshape(1, D)
    a_in = a.astype(f32).reshape(D, 1)
    if d_p != D:  # zero-padded D columns contribute exactly 0
        wk_in = jnp.zeros((F, d_p), f32).at[:, :D].set(wk_in)
        wq_in = jnp.zeros((F, d_p), f32).at[:, :D].set(wq_in)
        bias_in = jnp.zeros((1, d_p), f32).at[:, :D].set(bias_in)
        a_in = jnp.zeros((d_p, 1), f32).at[:D, :].set(a_in)

    grid = (B, pl.cdiv(nr_p, t_nr), pl.cdiv(na_p, t_na))

    out = pl.pallas_call(
        _make_kernel(cdt, t_nr),
        out_shape=jax.ShapeDtypeStruct((B, nr_p, na_p), f32),
        grid_spec=pltpu.PrefetchScalarGridSpec(
            num_scalar_prefetch=0,
            grid=grid,
            in_specs=[
                pl.BlockSpec((1, t_nr, F), lambda b, i, j: (b, i, 0)),   # receiver
                pl.BlockSpec((1, t_na, F), lambda b, i, j: (b, j, 0)),   # attendant
                pl.BlockSpec((F, d_p), lambda b, i, j: (0, 0)),          # w_k
                pl.BlockSpec((F, d_p), lambda b, i, j: (0, 0)),          # w_q
                pl.BlockSpec((1, d_p), lambda b, i, j: (0, 0)),          # bias
                pl.BlockSpec((d_p, 1), lambda b, i, j: (0, 0)),          # a (column)
            ],
            out_specs=pl.BlockSpec((1, t_nr, t_na), lambda b, i, j: (b, i, j)),
            scratch_shapes=[pltpu.VMEM((t_nr, d_p), f32)],               # keys+bias
        ),
        compiler_params=pltpu.CompilerParams(
            dimension_semantics=("parallel", "parallel", "arbitrary"),
            vmem_limit_bytes=32 * 1024 * 1024),
    )(recv_in, attd_in, wk_in, wq_in, bias_in, a_in)

    if nr_p != Nr or na_p != Na:
        out = out[:, :Nr, :Na]
    return out


def _xavier_uniform(key, shape, fan_in, fan_out, dtype=jnp.float32):
    bound = math.sqrt(6.0 / (fan_in + fan_out))
    return jax.random.uniform(key, shape, dtype=dtype, minval=-bound,
                              maxval=bound)


def init_params(key, n_features):
    d = n_features // 2
    k1, k2, k3, k4 = jax.random.split(key, 4)
    # nn.init.xavier_uniform_ semantics: fan_in = size(1), fan_out = size(0)
    w_q = _xavier_uniform(k1, (n_features, d), fan_in=d, fan_out=n_features)
    w_k = _xavier_uniform(k2, (n_features, d), fan_in=d, fan_out=n_features)
    # bias / a viewed as (d, 1): fan_in = 1, fan_out = d
    bias = _xavier_uniform(k3, (d,), fan_in=1, fan_out=d)
    a = _xavier_uniform(k4, (d,), fan_in=1, fan_out=d)
    return w_q, w_k, bias, a


def reference_forward(receiver, attendant, w_q, w_k, bias, a):
    keys = receiver @ w_k
    queries = attendant @ w_q
    e_act = queries[..., None, :, :] + keys[..., :, None, :] + bias
    return jnp.tanh(e_act) @ a


if __name__ == "__main__":
    n_features = 32     # F  (D = 16)
    B, Nr, Na = 2, 8, 8

    key = jax.random.PRNGKey(0)
    k_params, k_recv, k_attd = jax.random.split(key, 3)

    w_q, w_k, bias, a = init_params(k_params, n_features)
    receiver = jax.random.normal(k_recv, (B, Nr, n_features), jnp.float32)
    attendant = jax.random.normal(k_attd, (B, Na, n_features), jnp.float32)

    out = co_attention(receiver, attendant, w_k, w_q, bias, a)
    out = jax.block_until_ready(out)

    ref = reference_forward(receiver, attendant, w_q, w_k, bias, a)
    assert out.shape == (B, Nr, Na)

    if _compute_dtype() == jnp.bfloat16:
        atol = rtol = 5e-2   # bf16 inner math on v6e/v7x
    else:
        atol = rtol = 1e-5   # f32 path (v5e and others)
    err = float(jnp.max(jnp.abs(out - ref)))
    assert jnp.allclose(out, ref, atol=atol, rtol=rtol), f"max abs err {err}"

    print("KERNEL_OK")
</pallas_src>

<mosaic_0001>
module attributes {stable_mosaic.version = 11 : i64} {
  func.func @kernel(%arg0: i32, %arg1: i32, %arg2: i32, %arg3: memref<1x8x32xf32, #tpu.memory_space<vmem>>, %arg4: memref<1x128x32xf32, #tpu.memory_space<vmem>>, %arg5: memref<32x16xf32, #tpu.memory_space<vmem>>, %arg6: memref<32x16xf32, #tpu.memory_space<vmem>>, %arg7: memref<1x16xf32, #tpu.memory_space<vmem>>, %arg8: memref<16x1xf32, #tpu.memory_space<vmem>>, %arg9: memref<1x8x128xf32, #tpu.memory_space<vmem>>, %arg10: memref<8x16xf32, #tpu.memory_space<vmem>>) attributes {dimension_semantics = [#tpu.dimension_semantics<parallel>, #tpu.dimension_semantics<parallel>, #tpu.dimension_semantics<arbitrary>], iteration_bounds = array<i64: 2, 1, 1>, scalar_prefetch = 0 : i64, scratch_operands = 1 : i64, tpu.core_type = #tpu.core_type<tc>, window_params = [{transform_indices = @transform_0, window_bounds = array<i64: 1, 8, 32>}, {transform_indices = @transform_1, window_bounds = array<i64: 1, 128, 32>}, {pipeline_mode = #tpu.pipeline_mode<synchronous>, transform_indices = @transform_2, window_bounds = array<i64: 32, 16>}, {pipeline_mode = #tpu.pipeline_mode<synchronous>, transform_indices = @transform_3, window_bounds = array<i64: 32, 16>}, {pipeline_mode = #tpu.pipeline_mode<synchronous>, transform_indices = @transform_4, window_bounds = array<i64: 1, 16>}, {pipeline_mode = #tpu.pipeline_mode<synchronous>, transform_indices = @transform_5, window_bounds = array<i64: 16, 1>}, {transform_indices = @transform_6, window_bounds = array<i64: 1, 8, 128>}]} {
    %c0_i32 = arith.constant 0 : i32
    %0 = arith.cmpi eq, %arg2, %c0_i32 : i32
    %1 = arith.extui %0 : i1 to i32
    %c0_i32_0 = arith.constant 0 : i32
    %2 = arith.cmpi ne, %1, %c0_i32_0 : i32
    scf.if %2 {
      %c0_12 = arith.constant 0 : index
      %c0_13 = arith.constant 0 : index
      %c0_14 = arith.constant 0 : index
      %27 = vector.load %arg3[%c0_12, %c0_13, %c0_14] : memref<1x8x32xf32, #tpu.memory_space<vmem>>, vector<1x8x32xf32>
      %28 = vector.shape_cast %27 : vector<1x8x32xf32> to vector<8x32xf32>
      %c0_15 = arith.constant 0 : index
      %c0_16 = arith.constant 0 : index
      %29 = vector.load %arg5[%c0_15, %c0_16] : memref<32x16xf32, #tpu.memory_space<vmem>>, vector<32x16xf32>
      %cst_17 = arith.constant dense<0.000000e+00> : vector<8x16xf32>
      %30 = tpu.matmul %28, %29, %cst_17 {dimension_numbers = #tpu.dot_dimension_numbers<[1], [0], [0], [1], [0, 0, 1, 1], [], []>} : vector<8x32xf32>, vector<32x16xf32>, vector<8x16xf32> -> vector<8x16xf32>
      %c0_18 = arith.constant 0 : index
      %c0_19 = arith.constant 0 : index
      %31 = vector.load %arg7[%c0_18, %c0_19] : memref<1x16xf32, #tpu.memory_space<vmem>>, vector<1x16xf32>
      %32 = vector.broadcast %31 : vector<1x16xf32> to vector<8x16xf32>
      %33 = arith.addf %30, %32 : vector<8x16xf32>
      %c0_20 = arith.constant 0 : index
      %c0_21 = arith.constant 0 : index
      %34 = vector.load %arg10[%c0_20, %c0_21] : memref<8x16xf32, #tpu.memory_space<vmem>>, vector<8x16xf32>
      tpu.vector_store %arg10[%c0_20, %c0_21], %33 {strides = array<i32>} : memref<8x16xf32, #tpu.memory_space<vmem>>, vector<8x16xf32>,
    } else {
    }
    %c0 = arith.constant 0 : index
    %c0_1 = arith.constant 0 : index
    %c0_2 = arith.constant 0 : index
    %3 = vector.load %arg4[%c0, %c0_1, %c0_2] : memref<1x128x32xf32, #tpu.memory_space<vmem>>, vector<1x128x32xf32>
    %4 = vector.shape_cast %3 : vector<1x128x32xf32> to vector<128x32xf32>
    %c0_3 = arith.constant 0 : index
    %c0_4 = arith.constant 0 : index
    %5 = vector.load %arg6[%c0_3, %c0_4] : memref<32x16xf32, #tpu.memory_space<vmem>>, vector<32x16xf32>
    %cst = arith.constant dense<0.000000e+00> : vector<128x16xf32>
    %6 = tpu.matmul %4, %5, %cst {dimension_numbers = #tpu.dot_dimension_numbers<[1], [0], [0], [1], [0, 0, 1, 1], [], []>} : vector<128x32xf32>, vector<32x16xf32>, vector<128x16xf32> -> vector<128x16xf32>
    %7 = tpu.transpose %6, [1, 0] : vector<128x16xf32> -> vector<16x128xf32>
    %8 = vector.shape_cast %7 : vector<16x128xf32> to vector<1x16x128xf32>
    %c0_5 = arith.constant 0 : index
    %c0_6 = arith.constant 0 : index
    %9 = vector.load %arg8[%c0_5, %c0_6] : memref<16x1xf32, #tpu.memory_space<vmem>>, vector<16x1xf32>
    %10 = vector.shape_cast %9 : vector<16x1xf32> to vector<1x16x1xf32>
    %c0_i32_7 = arith.constant 0 : i32
    %c8_i32 = arith.constant 8 : i32
    %11 = arith.muli %c0_i32_7, %c8_i32 : i32
    %12 = tpu.assume_multiple %11, 8 : i32
    %13 = arith.index_cast %12 : i32 to index
    %c0_8 = arith.constant 0 : index
    %14 = vector.load %arg10[%13, %c0_8] : memref<8x16xf32, #tpu.memory_space<vmem>>, vector<8x16xf32>
    %15 = vector.shape_cast %14 : vector<8x16xf32> to vector<8x16x1xf32>
    %16 = vector.broadcast %15 : vector<8x16x1xf32> to vector<8x16x128xf32>
    %17 = vector.broadcast %8 : vector<1x16x128xf32> to vector<8x16x128xf32>
    %18 = arith.addf %16, %17 : vector<8x16x128xf32>
    %19 = math.tanh %18 : vector<8x16x128xf32>
    %20 = vector.broadcast %10 : vector<1x16x1xf32> to vector<8x16x128xf32>
    %21 = arith.mulf %19, %20 : vector<8x16x128xf32>
    %cst_9 = arith.constant dense<0.000000e+00> : vector<8x128xf32>
    %22 = vector.multi_reduction <add>, %21, %cst_9 [1] : vector<8x16x128xf32> to vector<8x128xf32>
    %c0_10 = arith.constant 0 : index
    %23 = arith.index_cast %12 : i32 to index
    %c0_11 = arith.constant 0 : index
    %24 = vector.load %arg9[%c0_10, %23, %c0_11] : memref<1x8x128xf32, #tpu.memory_space<vmem>>, vector<1x8x128xf32>
    %25 = vector.shape_cast %24 : vector<1x8x128xf32> to vector<8x128xf32>
    %26 = vector.shape_cast %22 : vector<8x128xf32> to vector<1x8x128xf32>
    tpu.vector_store %arg9[%c0_10, %23, %c0_11], %26 {strides = array<i32>} : memref<1x8x128xf32, #tpu.memory_space<vmem>>, vector<1x8x128xf32>,
    %c1_i32 = arith.constant 1 : i32
    return
  }
  func.func @transform_0(%arg0: i32, %arg1: i32, %arg2: i32) -> (i32, i32, i32) {
    %c0_i32 = arith.constant 0 : i32
    %c0_i32_0 = arith.constant 0 : i32
    return %arg0, %arg1, %c0_i32 : i32, i32, i32
  }
  func.func @transform_1(%arg0: i32, %arg1: i32, %arg2: i32) -> (i32, i32, i32) {
    %c0_i32 = arith.constant 0 : i32
    %c0_i32_0 = arith.constant 0 : i32
    return %arg0, %arg2, %c0_i32 : i32, i32, i32
  }
  func.func @transform_2(%arg0: i32, %arg1: i32, %arg2: i32) -> (i32, i32) {
    %c0_i32 = arith.constant 0 : i32
    %c0_i32_0 = arith.constant 0 : i32
    %c0_i32_1 = arith.constant 0 : i32
    return %c0_i32, %c0_i32_0 : i32, i32
  }
  func.func @transform_3(%arg0: i32, %arg1: i32, %arg2: i32) -> (i32, i32) {
    %c0_i32 = arith.constant 0 : i32
    %c0_i32_0 = arith.constant 0 : i32
    %c0_i32_1 = arith.constant 0 : i32
    return %c0_i32, %c0_i32_0 : i32, i32
  }
  func.func @transform_4(%arg0: i32, %arg1: i32, %arg2: i32) -> (i32, i32) {
    %c0_i32 = arith.constant 0 : i32
    %c0_i32_0 = arith.constant 0 : i32
    %c0_i32_1 = arith.constant 0 : i32
    return %c0_i32, %c0_i32_0 : i32, i32
  }
  func.func @transform_5(%arg0: i32, %arg1: i32, %arg2: i32) -> (i32, i32) {
    %c0_i32 = arith.constant 0 : i32
    %c0_i32_0 = arith.constant 0 : i32
    %c0_i32_1 = arith.constant 0 : i32
    return %c0_i32, %c0_i32_0 : i32, i32
  }
  func.func @transform_6(%arg0: i32, %arg1: i32, %arg2: i32) -> (i32, i32, i32) {
    %c0_i32 = arith.constant 0 : i32
    return %arg0, %arg1, %arg2 : i32, i32, i32
  }
}

</mosaic_0001>

<llo_original>
// kernel: tpu_custom_call.1
$region0: #{tpu_custom_call.1}
  #allocation0 [shape = 'u32[]', space=smem, size = 0x4, offset = 0x4, fixed_abs, tag = 'smem constant byte address 0x4 - core index']
  #allocation1 [shape = 'u32[144,128]{1,0:T(1,128)}', space=vmem, size = 0x12000, scoped, tag = 'internal scratch']
  #allocation2 [shape = 'f32[8,16]{1,0:T(8,128)}', space=vmem, size = 0x1000, scoped, tag = 'scratch operand']
  %s0 = inlined_call_operand.vmem [shape: f32[2,8,32], index: 0, kind: input, shape index: {}]
  %s1 = inlined_call_operand.vmem [shape: f32[2,128,32], index: 1, kind: input, shape index: {}]
  %s2 = inlined_call_operand.vmem [shape: f32[32,16], index: 2, kind: input, shape index: {}]
  %s3 = inlined_call_operand.vmem [shape: f32[32,16], index: 3, kind: input, shape index: {}]
  %s4 = inlined_call_operand.vmem [shape: f32[1,16], index: 4, kind: input, shape index: {}]
  %s5 = inlined_call_operand.vmem [shape: f32[16,1], index: 5, kind: input, shape index: {}]
  %s6 = inlined_call_operand.hbm [shape: f32[2,8,128], index: 6, kind: output, shape index: {}]
  %s7 = sld [smem:[#allocation0]]
  $region61: #{tpu_custom_call.1} parent=0
    _
  %s9 = ssub.s32 1, %s7
  %s10 = scalar_select 0, %s9, %s7
  $region1: #{tpu_custom_call.1} parent=0
    #allocation3 [shape = 'u8[8192]{0}', space=vmem, size = 0x2000, scoped, tag = 'output window, operand 0']
    #allocation4 [shape = 's32[2]{0}', space=sflag, size = 0x8, scoped, tag = 'scoped memory for tpu_custom_call.1']
    %11 = vsyncpa [#allocation4], 0
    %s12 = scalar_lea.sflag [#allocation4], 1
    %13 = vsyncpa %s12, 0
    loop: start=0, step=1, limit=4
    $region2: #{tpu_custom_call.1} parent=1 // loop_pre_header
      _
    $region3: #{tpu_custom_call.1} parent=1 // loop_header
      %s15 = sphi 0, %s19
      %p16 = scmp.ge.s32.totalorder %s15, 4
      %s22 = sphi 0, %s41
      %s23 = sphi 0, %s37
      %s24 = sphi 0, %s33
      %s25 = sphi 0, %s22
      %s26 = sphi 0, %s23
      %s27 = sphi 0, %s24
      %s28 = sphi 0, %s25
      %s29 = sphi 0, %s26
      %s30 = sphi 0, %s27
      %s46 = sphi 0, %s48
      %s49 = sphi 0, %s46
      %s50 = sphi 0, %s49
      %s66 = sphi 0, %s50
      %s74 = sphi 0, %s76
      %s77 = sphi 0, %s74
      %s78 = sphi 0, %s77
      %s94 = sphi 0, %s78
      %s98 = sphi 0, %s98
      %s100 = sphi 0, %s98
      %s101 = sphi 0, %s100
      %s115 = sphi 0, %s101
      %s119 = sphi 0, %s119
      %s121 = sphi 0, %s119
      %s122 = sphi 0, %s121
      %s136 = sphi 0, %s122
      %s140 = sphi 0, %s140
      %s142 = sphi 0, %s140
      %s143 = sphi 0, %s142
      %s157 = sphi 0, %s143
      %s161 = sphi 0, %s161
      %s163 = sphi 0, %s161
      %s164 = sphi 0, %s163
      %s178 = sphi 0, %s164
      %s188 = sphi 0, %s190
      %s191 = sphi 0, %s188
      %s192 = sphi 0, %s191
      %s208 = sphi 0, %s192
    $region4: #{tpu_custom_call.1} parent=1 // loop_header_branch
      %18 = sbr.rel (%p16) target = $region8
    $region5: #{tpu_custom_call.1} parent=1 // loop_body
      %s20 = ssub.s32 %s15, 1
      %s21 = ssub.s32 %s15, 2
      %s31 = sadd.s32 1, %s24
      %p32 = scmp.ge.s32.totalorder %s31, 1
      %s33 = scalar_select %p32, 0, %s31
      %s34 = sadd.s32 1, %s23
      %s35 = scalar_select %p32, %s34, %s23
      %p36 = scmp.ge.s32.totalorder %s35, 1
      %s37 = scalar_select %p36, 0, %s35
      %s38 = sadd.s32 1, %s22
      %s39 = scalar_select %p36, %s38, %s22
      %p40 = scmp.ge.s32.totalorder %s39, 2
      %s41 = scalar_select %p40, 0, %s39
      %s42 = ssub.s32 %s22, %s41
      %s43 = ssub.s32 %s23, %s37
      %s44 = sor.u32 %s42, %s43
      %p45 = scmp.eq.s32.totalorder %s44, 0
      %s47 = sadd.s32 %s46, 1
      %s48 = scalar_select %p45, %s46, %s47
      %p51 = pneg %p45
      %p52 = scmp.eq.s32.totalorder %s15, 1
      %p53 = por %p51, %p52
      %p54 = scmp.ne.s32.totalorder %s46, %s49
      %p55 = scmp.eq.s32.totalorder %s15, 0
      %p56 = por %p54, %p55
      %p57 = scmp.ne.s32.totalorder %s46, %s49
      %p58 = scmp.eq.s32.totalorder %s20, 1
      %p59 = por %p57, %p58
      %p60 = scmp.ne.s32.totalorder %s49, %s50
      %p61 = scmp.eq.s32.totalorder %s20, 0
      %p62 = por %p60, %p61
      %p63 = scmp.ne.s32.totalorder %s49, %s50
      %p64 = scmp.eq.s32.totalorder %s21, 1
      %p65 = por %p63, %p64
      %p67 = scmp.ne.s32.totalorder %s50, %s66
      %p68 = scmp.eq.s32.totalorder %s21, 0
      %p69 = por %p67, %p68
      %s70 = ssub.s32 %s22, %s41
      %s71 = ssub.s32 %s24, %s33
      %s72 = sor.u32 %s70, %s71
      %p73 = scmp.eq.s32.totalorder %s72, 0
      %s75 = sadd.s32 %s74, 1
      %s76 = scalar_select %p73, %s74, %s75
      %p79 = pneg %p73
      %p80 = scmp.eq.s32.totalorder %s15, 1
      %p81 = por %p79, %p80
      %p82 = scmp.ne.s32.totalorder %s74, %s77
      %p83 = scmp.eq.s32.totalorder %s15, 0
      %p84 = por %p82, %p83
      %p85 = scmp.ne.s32.totalorder %s74, %s77
      %p86 = scmp.eq.s32.totalorder %s20, 1
      %p87 = por %p85, %p86
      %p88 = scmp.ne.s32.totalorder %s77, %s78
      %p89 = scmp.eq.s32.totalorder %s20, 0
      %p90 = por %p88, %p89
      %p91 = scmp.ne.s32.totalorder %s77, %s78
      %p92 = scmp.eq.s32.totalorder %s21, 1
      %p93 = por %p91, %p92
      %p95 = scmp.ne.s32.totalorder %s78, %s94
      %p96 = scmp.eq.s32.totalorder %s21, 0
      %p97 = por %p95, %p96
      %s99 = sadd.s32 %s98, 1
      %p102 = scmp.eq.s32.totalorder %s15, 1
      %p103 = scmp.ne.s32.totalorder %s98, %s100
      %p104 = scmp.eq.s32.totalorder %s15, 0
      %p105 = por %p103, %p104
      %p106 = scmp.ne.s32.totalorder %s98, %s100
      %p107 = scmp.eq.s32.totalorder %s20, 1
      %p108 = por %p106, %p107
      %p109 = scmp.ne.s32.totalorder %s100, %s101
      %p110 = scmp.eq.s32.totalorder %s20, 0
      %p111 = por %p109, %p110
      %p112 = scmp.ne.s32.totalorder %s100, %s101
      %p113 = scmp.eq.s32.totalorder %s21, 1
      %p114 = por %p112, %p113
      %p116 = scmp.ne.s32.totalorder %s101, %s115
      %p117 = scmp.eq.s32.totalorder %s21, 0
      %p118 = por %p116, %p117
      %s120 = sadd.s32 %s119, 1
      %p123 = scmp.eq.s32.totalorder %s15, 1
      %p124 = scmp.ne.s32.totalorder %s119, %s121
      %p125 = scmp.eq.s32.totalorder %s15, 0
      %p126 = por %p124, %p125
      %p127 = scmp.ne.s32.totalorder %s119, %s121
      %p128 = scmp.eq.s32.totalorder %s20, 1
      %p129 = por %p127, %p128
      %p130 = scmp.ne.s32.totalorder %s121, %s122
      %p131 = scmp.eq.s32.totalorder %s20, 0
      %p132 = por %p130, %p131
      %p133 = scmp.ne.s32.totalorder %s121, %s122
      %p134 = scmp.eq.s32.totalorder %s21, 1
      %p135 = por %p133, %p134
      %p137 = scmp.ne.s32.totalorder %s122, %s136
      %p138 = scmp.eq.s32.totalorder %s21, 0
      %p139 = por %p137, %p138
      %s141 = sadd.s32 %s140, 1
      %p144 = scmp.eq.s32.totalorder %s15, 1
      %p145 = scmp.ne.s32.totalorder %s140, %s142
      %p146 = scmp.eq.s32.totalorder %s15, 0
      %p147 = por %p145, %p146
      %p148 = scmp.ne.s32.totalorder %s140, %s142
      %p149 = scmp.eq.s32.totalorder %s20, 1
      %p150 = por %p148, %p149
      %p151 = scmp.ne.s32.totalorder %s142, %s143
      %p152 = scmp.eq.s32.totalorder %s20, 0
      %p153 = por %p151, %p152
      %p154 = scmp.ne.s32.totalorder %s142, %s143
      %p155 = scmp.eq.s32.totalorder %s21, 1
      %p156 = por %p154, %p155
      %p158 = scmp.ne.s32.totalorder %s143, %s157
      %p159 = scmp.eq.s32.totalorder %s21, 0
      %p160 = por %p158, %p159
      %s162 = sadd.s32 %s161, 1
      %p165 = scmp.eq.s32.totalorder %s15, 1
      %p166 = scmp.ne.s32.totalorder %s161, %s163
      %p167 = scmp.eq.s32.totalorder %s15, 0
      %p168 = por %p166, %p167
      %p169 = scmp.ne.s32.totalorder %s161, %s163
      %p170 = scmp.eq.s32.totalorder %s20, 1
      %p171 = por %p169, %p170
      %p172 = scmp.ne.s32.totalorder %s163, %s164
      %p173 = scmp.eq.s32.totalorder %s20, 0
      %p174 = por %p172, %p173
      %p175 = scmp.ne.s32.totalorder %s163, %s164
      %p176 = scmp.eq.s32.totalorder %s21, 1
      %p177 = por %p175, %p176
      %p179 = scmp.ne.s32.totalorder %s164, %s178
      %p180 = scmp.eq.s32.totalorder %s21, 0
      %p181 = por %p179, %p180
      %s182 = ssub.s32 %s22, %s41
      %s183 = ssub.s32 %s23, %s37
      %s184 = sor.u32 %s182, %s183
      %s185 = ssub.s32 %s24, %s33
      %s186 = sor.u32 %s184, %s185
      %p187 = scmp.eq.s32.totalorder %s186, 0
      %s189 = sadd.s32 %s188, 1
      %s190 = scalar_select %p187, %s188, %s189
      %p193 = pneg %p187
      %p194 = scmp.eq.s32.totalorder %s15, 1
      %p195 = por %p193, %p194
      %p196 = scmp.ne.s32.totalorder %s188, %s191
      %p197 = scmp.eq.s32.totalorder %s15, 0
      %p198 = por %p196, %p197
      %p199 = scmp.ne.s32.totalorder %s188, %s191
      %p200 = scmp.eq.s32.totalorder %s20, 1
      %p201 = por %p199, %p200
      %p202 = scmp.ne.s32.totalorder %s191, %s192
      %p203 = scmp.eq.s32.totalorder %s20, 0
      %p204 = por %p202, %p203
      %p205 = scmp.ne.s32.totalorder %s191, %s192
      %p206 = scmp.eq.s32.totalorder %s21, 1
      %p207 = por %p205, %p206
      %p209 = scmp.ne.s32.totalorder %s192, %s208
      %p210 = scmp.eq.s32.totalorder %s21, 0
      %p211 = por %p209, %p210
      %p212 = scmp.le.s32.totalorder 1, %s15
      %p213 = scmp.lt.s32.totalorder %s15, 3
      %p214 = pnand %p212, %p213
      %p215 = pneg %p214
      // Predicated region
      $region9: #{tpu_custom_call.1} parent=5 // pred_check
        _
      $region10: #{tpu_custom_call.1} parent=5 // pred_check_branch
        %217 = sbr.rel (%p214) target = $region12
      $region11: #{tpu_custom_call.1} parent=5 // pred_region
        %s218 = ssub.s32 %s15, 1
        // Predicated region
        $region13: #{tpu_custom_call.1} parent=11 // pred_check
          %p219 = pneg %p111
        $region14: #{tpu_custom_call.1} parent=11 // pred_check_branch
          %221 = sbr.rel (%p219) target = $region16
        $region15: #{tpu_custom_call.1} parent=11 // pred_region
          _
        $region16: #{tpu_custom_call.1} parent=11 // pred_fallthru
          _
        // Predicated region
        $region17: #{tpu_custom_call.1} parent=11 // pred_check
          %p222 = pneg %p132
        $region18: #{tpu_custom_call.1} parent=11 // pred_check_branch
          %224 = sbr.rel (%p222) target = $region20
        $region19: #{tpu_custom_call.1} parent=11 // pred_region
          _
        $region20: #{tpu_custom_call.1} parent=11 // pred_fallthru
          _
        // Predicated region
        $region21: #{tpu_custom_call.1} parent=11 // pred_check
          %p225 = pneg %p153
        $region22: #{tpu_custom_call.1} parent=11 // pred_check_branch
          %227 = sbr.rel (%p225) target = $region24
        $region23: #{tpu_custom_call.1} parent=11 // pred_region
          _
        $region24: #{tpu_custom_call.1} parent=11 // pred_fallthru
          _
        // Predicated region
        $region25: #{tpu_custom_call.1} parent=11 // pred_check
          %p228 = pneg %p174
        $region26: #{tpu_custom_call.1} parent=11 // pred_check_branch
          %230 = sbr.rel (%p228) target = $region28
        $region27: #{tpu_custom_call.1} parent=11 // pred_region
          _
        $region28: #{tpu_custom_call.1} parent=11 // pred_fallthru
          _
      $region12: #{tpu_custom_call.1} parent=5 // pred_fallthru
        _
      %p231 = scmp.lt.s32.totalorder %s15, 2
      // Predicated region
      $region29: #{tpu_custom_call.1} parent=5 // pred_check
        %p232 = pneg %p231
      $region30: #{tpu_custom_call.1} parent=5 // pred_check_branch
        %234 = sbr.rel (%p232) target = $region32
      $region31: #{tpu_custom_call.1} parent=5 // pred_region
        // Predicated region
        $region33: #{tpu_custom_call.1} parent=31 // pred_check
          %p235 = pneg %p56
        $region34: #{tpu_custom_call.1} parent=31 // pred_check_branch
          %237 = sbr.rel (%p235) target = $region36
        $region35: #{tpu_custom_call.1} parent=31 // pred_region
          %p238 = scmp.lt.s32.totalorder %s22, 1
          %s239 = scalar_select %p238, %s22, 1
          %p240 = scmp.lt.s32.totalorder %s23, 0
          %s241 = scalar_select %p240, %s23, 0
          %s242 = sadd.s32 %s241, %s239
          %s243 = smul.addr %s242, 8
          %s244 = scalar_lea.vmem %s0, %s243
        $region36: #{tpu_custom_call.1} parent=31 // pred_fallthru
          _
        // Predicated region
        $region37: #{tpu_custom_call.1} parent=31 // pred_check
          %p245 = pneg %p84
        $region38: #{tpu_custom_call.1} parent=31 // pred_check_branch
          %247 = sbr.rel (%p245) target = $region40
        $region39: #{tpu_custom_call.1} parent=31 // pred_region
          %s248 = smul.u32 16, %s24
          %p249 = scmp.lt.s32.totalorder %s22, 1
          %s250 = scalar_select %p249, %s22, 1
          %p251 = scmp.lt.s32.totalorder %s248, 15
          %s252 = scalar_select %p251, %s248, 15
          %s253 = smul.addr %s250, 16
          %s254 = sadd.s32 %s252, %s253
          %s255 = smul.addr %s254, 8
          %s256 = scalar_lea.vmem %s1, %s255
          %s257 = smul.u32 16, %s24
        $region40: #{tpu_custom_call.1} parent=31 // pred_fallthru
          _
      $region32: #{tpu_custom_call.1} parent=5 // pred_fallthru
        _
      %p258 = scmp.le.s32.totalorder 1, %s15
      %p259 = scmp.lt.s32.totalorder %s15, 3
      %p260 = pnand %p258, %p259
      %p261 = pneg %p260
      // Predicated region
      $region41: #{tpu_custom_call.1} parent=5 // pred_check
        _
      $region42: #{tpu_custom_call.1} parent=5 // pred_check_branch
        %263 = sbr.rel (%p260) target = $region44
      $region43: #{tpu_custom_call.1} parent=5 // pred_region
        %s264 = ssub.s32 %s15, 1
        %p265 = scmp.lt.s32.totalorder %s25, 1
        %s266 = scalar_select %p265, %s25, 1
        %p267 = scmp.lt.s32.totalorder %s26, 0
        %s268 = scalar_select %p267, %s26, 0
        %s269 = sadd.s32 %s268, %s266
        %s270 = smul.addr %s269, 8
        %s271 = scalar_lea.vmem %s0, %s270
        %p272 = pneg %p62
        %p273 = pneg %p59
        %s274 = smul.u32 16, %s27
        %p275 = scmp.lt.s32.totalorder %s25, 1
        %s276 = scalar_select %p275, %s25, 1
        %p277 = scmp.lt.s32.totalorder %s274, 15
        %s278 = scalar_select %p277, %s274, 15
        %s279 = smul.addr %s276, 16
        %s280 = sadd.s32 %s278, %s279
        %s281 = smul.addr %s280, 8
        %s282 = scalar_lea.vmem %s1, %s281
        %p283 = pneg %p90
        %p284 = pneg %p87
        %p285 = pneg %p111
        %p286 = pneg %p108
        %p287 = pneg %p132
        %p288 = pneg %p129
        %p289 = pneg %p153
        %p290 = pneg %p150
        %p291 = pneg %p174
        %p292 = pneg %p171
        %p293 = pneg %p204
        %p294 = pneg %p201
        %s295 = sand.u32 %s191, 1
        %s296 = scalar_lea.sflag [#allocation4], %s295
        %s297 = sand.u32 %s191, 1
        %s298 = smul.addr %s297, 8
        %s299 = scalar_lea.vmem [#allocation3], %s298
        %p300 = scmp.lt.s32.totalorder %s25, 1
        %s301 = scalar_select %p300, %s25, 1
        %p302 = scmp.lt.s32.totalorder %s26, 0
        %s303 = scalar_select %p302, %s26, 0
        %s304 = sadd.s32 %s303, %s301
        %s305 = smul.addr %s304, 8
        %s306 = scalar_lea.vmem %s0, %s305
        %s307 = smul.u32 16, %s27
        %p308 = scmp.lt.s32.totalorder %s25, 1
        %s309 = scalar_select %p308, %s25, 1
        %p310 = scmp.lt.s32.totalorder %s307, 15
        %s311 = scalar_select %p310, %s307, 15
        %s312 = smul.addr %s309, 16
        %s313 = sadd.s32 %s311, %s312
        %s314 = smul.addr %s313, 8
        %s315 = scalar_lea.vmem %s1, %s314
        %s316 = smul.u32 16, %s27
        %p317 = scmp.eq.s32.totalorder %s27, 0
        // Predicated region
        $region45: #{tpu_custom_call.1} parent=43 // pred_check
          %p318 = pneg %p317
        $region46: #{tpu_custom_call.1} parent=43 // pred_check_branch
          %320 = sbr.rel (%p318) target = $region48
        $region47: #{tpu_custom_call.1} parent=43 // pred_region
          %v321 = vld [vmem:[%s306] sm:$0xff]
          %v322 = vld [vmem:[%s2] sm:$0xff]
          %v323 = vld [vmem:[%s2 + $0x8] sm:$0xff]
          %v324 = vld [vmem:[%s2 + $0x10] sm:$0xff]
          %v325 = vld [vmem:[%s2 + $0x18] sm:$0xff]
          %v326 = vld [vmem:[%s4] sm:$0x1]
          %v328 = vlaneseq
          %v329 = vshrl.u32 %v328, 7
          %v330 = vsub.s32 0, %v329
          %v331 = vrot.slane %v326, %v330
          %vm333 = vcmask 261120
          %v335 = vsel %vm333, %v321, 0
          %337 = vmatprep.subr.mxu0 0.0
          %338 = vmatpush1.msra.mxu0 %v322
          %339 = vmatprep.subr.mxu0 0.0
          %340 = vmatpush1.msra.mxu0 %v323
          %341 = vmatprep.subr.mxu0 0.0
          %342 = vmatpush1.msra.mxu0 %v324
          %343 = vmatprep.subr.mxu0 0.0
          %344 = vmatpush1.msra.mxu0 %v325
          %345 = vmatprep.subr.mxu0 0.0
          %346 = vmatpush1.msra.mxu0 0.0
          %347 = vmatprep.subr.mxu0 0.0
          %348 = vmatpush1.msra.mxu0 0.0
          %349 = vmatprep.subr.mxu0 0.0
          %350 = vmatpush1.msra.mxu0 0.0
          %351 = vmatprep.subr.mxu0 0.0
          %352 = vmatpush1.msra.mxu0 0.0
          %353 = vmatprep.subr.mxu0 0.0
          %354 = vmatpush1.msra.mxu0 0.0
          %355 = vmatprep.subr.mxu0 0.0
          %356 = vmatpush1.msra.mxu0 0.0
          %357 = vmatprep.subr.mxu0 0.0
          %358 = vmatpush1.msra.mxu0 0.0
          %359 = vmatprep.subr.mxu0 0.0
          %360 = vmatpush1.msra.mxu0 0.0
          %361 = vmatprep.subr.mxu0 0.0
          %362 = vmatpush1.msra.mxu0 0.0
          %363 = vmatprep.subr.mxu0 0.0
          %364 = vmatpush1.msra.mxu0 0.0
          %365 = vmatprep.subr.mxu0 0.0
          %366 = vmatpush1.msra.mxu0 0.0
          %367 = vmatprep.subr.mxu0 0.0
          %368 = vmatpush1.msra.mxu0 0.0
          %369 = vmatprep.subr.mxu0 0.0
          %370 = vmatpush1.msra.mxu0 0.0
          %371 = vmatprep.subr.mxu0 0.0
          %372 = vmatpush1.msra.mxu0 0.0
          %373 = vmatprep.subr.mxu0 0.0
          %374 = vmatpush1.msra.mxu0 0.0
          %375 = vmatprep.subr.mxu0 0.0
          %376 = vmatpush1.msra.mxu0 0.0
          %377 = vmatprep.subr.mxu0 0.0
          %378 = vmatpush1.msra.mxu0 0.0
          %379 = vmatprep.subr.mxu0 0.0
          %380 = vmatpush1.msra.mxu0 0.0
          %381 = vmatprep.subr.mxu0 0.0
          %382 = vmatpush1.msra.mxu0 0.0
          %383 = vmatprep.subr.mxu0 0.0
          %384 = vmatpush1.msra.mxu0 0.0
          %385 = vmatprep.subr.mxu0 0.0
          %386 = vmatpush1.msra.mxu0 0.0
          %387 = vmatprep.subr.mxu0 0.0
          %388 = vmatpush1.msra.mxu0 0.0
          %389 = vmatprep.subr.mxu0 0.0
          %390 = vmatpush1.msra.mxu0 0.0
          %391 = vmatprep.subr.mxu0 0.0
          %392 = vmatpush1.msra.mxu0 0.0
          %393 = vmatprep.subr.mxu0 0.0
          %394 = vmatpush1.msra.mxu0 0.0
          %395 = vmatprep.subr.mxu0 0.0
          %396 = vmatpush1.msra.mxu0 0.0
          %397 = vmatprep.subr.mxu0 0.0
          %398 = vmatpush1.msra.mxu0 0.0
          %399 = vmatprep.subr.mxu0 0.0
          %400 = vmatpush1.msra.mxu0 0.0
          %401 = vmatprep.mubr.f32.mxu0 0.0
          %402 = vmatmul.mubr.f32.gmra.mrb[0].mxu0 %v335
          %v403 = vpop.f32.mrb[0].mxu0
          %v404 = vadd.f32 %v331, %v403
          %v405 = vpop.f32.mrb[0].mxu0
          %406 = vdwg.mxu0
          %vm407 = vcmask 130048
          %408 = vst.msk [vmem:[#allocation2] sm:$0xff] %vm407, %v404
        $region48: #{tpu_custom_call.1} parent=43 // pred_fallthru
          _
        %v409 = vld [vmem:[%s315] sm:$0xff]
        %v410 = vld [vmem:[%s315 + $0x8] sm:$0xff]
        %v411 = vld [vmem:[%s315 + $0x10] sm:$0xff]
        %v412 = vld [vmem:[%s315 + $0x18] sm:$0xff]
        %v413 = vld [vmem:[%s315 + $0x20] sm:$0xff]
        %v414 = vld [vmem:[%s315 + $0x28] sm:$0xff]
        %v415 = vld [vmem:[%s315 + $0x30] sm:$0xff]
        %v416 = vld [vmem:[%s315 + $0x38] sm:$0xff]
        %v417 = vld [vmem:[%s315 + $0x40] sm:$0xff]
        %v418 = vld [vmem:[%s315 + $0x48] sm:$0xff]
        %v419 = vld [vmem:[%s315 + $0x50] sm:$0xff]
        %v420 = vld [vmem:[%s315 + $0x58] sm:$0xff]
        %v421 = vld [vmem:[%s315 + $0x60] sm:$0xff]
        %v422 = vld [vmem:[%s315 + $0x68] sm:$0xff]
        %v423 = vld [vmem:[%s315 + $0x70] sm:$0xff]
        %v424 = vld [vmem:[%s315 + $0x78] sm:$0xff]
        %v425 = vld [vmem:[%s3] sm:$0xff]
        %v426 = vld [vmem:[%s3 + $0x8] sm:$0xff]
        %v427 = vld [vmem:[%s3 + $0x10] sm:$0xff]
        %v428 = vld [vmem:[%s3 + $0x18] sm:$0xff]
        %vm429 = vcmask 261120
        %v431 = vsel %vm429, %v409, 0
        %v434 = vsel %vm429, %v410, 0
        %v437 = vsel %vm429, %v411, 0
        %v440 = vsel %vm429, %v412, 0
        %v443 = vsel %vm429, %v413, 0
        %v446 = vsel %vm429, %v414, 0
        %v449 = vsel %vm429, %v415, 0
        %v452 = vsel %vm429, %v416, 0
        %v455 = vsel %vm429, %v417, 0
        %v458 = vsel %vm429, %v418, 0
        %v461 = vsel %vm429, %v419, 0
        %v464 = vsel %vm429, %v420, 0
        %v467 = vsel %vm429, %v421, 0
        %v470 = vsel %vm429, %v422, 0
        %v473 = vsel %vm429, %v423, 0
        %v476 = vsel %vm429, %v424, 0
        %478 = vmatprep.subr.mxu0 0.0
        %479 = vmatpush1.msra.mxu0 %v425
        %480 = vmatprep.subr.mxu0 0.0
        %481 = vmatpush1.msra.mxu0 %v426
        %482 = vmatprep.subr.mxu0 0.0
        %483 = vmatpush1.msra.mxu0 %v427
        %484 = vmatprep.subr.mxu0 0.0
        %485 = vmatpush1.msra.mxu0 %v428
        %486 = vmatprep.subr.mxu0 0.0
        %487 = vmatpush1.msra.mxu0 0.0
        %488 = vmatprep.subr.mxu0 0.0
        %489 = vmatpush1.msra.mxu0 0.0
        %490 = vmatprep.subr.mxu0 0.0
        %491 = vmatpush1.msra.mxu0 0.0
        %492 = vmatprep.subr.mxu0 0.0
        %493 = vmatpush1.msra.mxu0 0.0
        %494 = vmatprep.subr.mxu0 0.0
        %495 = vmatpush1.msra.mxu0 0.0
        %496 = vmatprep.subr.mxu0 0.0
        %497 = vmatpush1.msra.mxu0 0.0
        %498 = vmatprep.subr.mxu0 0.0
        %499 = vmatpush1.msra.mxu0 0.0
        %500 = vmatprep.subr.mxu0 0.0
        %501 = vmatpush1.msra.mxu0 0.0
        %502 = vmatprep.subr.mxu0 0.0
        %503 = vmatpush1.msra.mxu0 0.0
        %504 = vmatprep.subr.mxu0 0.0
        %505 = vmatpush1.msra.mxu0 0.0
        %506 = vmatprep.subr.mxu0 0.0
        %507 = vmatpush1.msra.mxu0 0.0
        %508 = vmatprep.subr.mxu0 0.0
        %509 = vmatpush1.msra.mxu0 0.0
        %510 = vmatprep.subr.mxu0 0.0
        %511 = vmatpush1.msra.mxu0 0.0
        %512 = vmatprep.subr.mxu0 0.0
        %513 = vmatpush1.msra.mxu0 0.0
        %514 = vmatprep.subr.mxu0 0.0
        %515 = vmatpush1.msra.mxu0 0.0
        %516 = vmatprep.subr.mxu0 0.0
        %517 = vmatpush1.msra.mxu0 0.0
        %518 = vmatprep.subr.mxu0 0.0
        %519 = vmatpush1.msra.mxu0 0.0
        %520 = vmatprep.subr.mxu0 0.0
        %521 = vmatpush1.msra.mxu0 0.0
        %522 = vmatprep.subr.mxu0 0.0
        %523 = vmatpush1.msra.mxu0 0.0
        %524 = vmatprep.subr.mxu0 0.0
        %525 = vmatpush1.msra.mxu0 0.0
        %526 = vmatprep.subr.mxu0 0.0
        %527 = vmatpush1.msra.mxu0 0.0
        %528 = vmatprep.subr.mxu0 0.0
        %529 = vmatpush1.msra.mxu0 0.0
        %530 = vmatprep.subr.mxu0 0.0
        %531 = vmatpush1.msra.mxu0 0.0
        %532 = vmatprep.subr.mxu0 0.0
        %533 = vmatpush1.msra.mxu0 0.0
        %534 = vmatprep.subr.mxu0 0.0
        %535 = vmatpush1.msra.mxu0 0.0
        %536 = vmatprep.subr.mxu0 0.0
        %537 = vmatpush1.msra.mxu0 0.0
        %538 = vmatprep.subr.mxu0 0.0
        %539 = vmatpush1.msra.mxu0 0.0
        %540 = vmatprep.subr.mxu0 0.0
        %541 = vmatpush1.msra.mxu0 0.0
        %542 = vmatprep.mubr.f32.mxu0 0.0
        %543 = vmatmul.mubr.f32.gmra.mrb[0].mxu0 %v431
        %v544 = vpop.f32.mrb[0].mxu0
        %v545 = vadd.f32 0.0, %v544
        %v546 = vpop.f32.mrb[0].mxu0
        %547 = vmatprep.mubr.f32.mxu0 0.0
        %548 = vmatmul.mubr.f32.gmra.mrb[0].mxu0 %v434
        %v549 = vpop.f32.mrb[0].mxu0
        %v550 = vadd.f32 0.0, %v549
        %v551 = vpop.f32.mrb[0].mxu0
        %552 = vmatprep.mubr.f32.mxu0 0.0
        %553 = vmatmul.mubr.f32.gmra.mrb[0].mxu0 %v437
        %v554 = vpop.f32.mrb[0].mxu0
        %v555 = vadd.f32 0.0, %v554
        %v556 = vpop.f32.mrb[0].mxu0
        %557 = vmatprep.mubr.f32.mxu0 0.0
        %558 = vmatmul.mubr.f32.gmra.mrb[0].mxu0 %v440
        %v559 = vpop.f32.mrb[0].mxu0
        %v560 = vadd.f32 0.0, %v559
        %v561 = vpop.f32.mrb[0].mxu0
        %562 = vmatprep.mubr.f32.mxu0 0.0
        %563 = vmatmul.mubr.f32.gmra.mrb[0].mxu0 %v443
        %v564 = vpop.f32.mrb[0].mxu0
        %v565 = vadd.f32 0.0, %v564
        %v566 = vpop.f32.mrb[0].mxu0
        %567 = vmatprep.mubr.f32.mxu0 0.0
        %568 = vmatmul.mubr.f32.gmra.mrb[0].mxu0 %v446
        %v569 = vpop.f32.mrb[0].mxu0
        %v570 = vadd.f32 0.0, %v569
        %v571 = vpop.f32.mrb[0].mxu0
        %572 = vmatprep.mubr.f32.mxu0 0.0
        %573 = vmatmul.mubr.f32.gmra.mrb[0].mxu0 %v449
        %v574 = vpop.f32.mrb[0].mxu0
        %v575 = vadd.f32 0.0, %v574
        %v576 = vpop.f32.mrb[0].mxu0
        %577 = vmatprep.mubr.f32.mxu0 0.0
        %578 = vmatmul.mubr.f32.gmra.mrb[0].mxu0 %v452
        %v579 = vpop.f32.mrb[0].mxu0
        %v580 = vadd.f32 0.0, %v579
        %v581 = vpop.f32.mrb[0].mxu0
        %582 = vmatprep.mubr.f32.mxu0 0.0
        %583 = vmatmul.mubr.f32.gmra.mrb[0].mxu0 %v455
        %v584 = vpop.f32.mrb[0].mxu0
        %v585 = vadd.f32 0.0, %v584
        %v586 = vpop.f32.mrb[0].mxu0
        %587 = vmatprep.mubr.f32.mxu0 0.0
        %588 = vmatmul.mubr.f32.gmra.mrb[0].mxu0 %v458
        %v589 = vpop.f32.mrb[0].mxu0
        %v590 = vadd.f32 0.0, %v589
        %v591 = vpop.f32.mrb[0].mxu0
        %592 = vmatprep.mubr.f32.mxu0 0.0
        %593 = vmatmul.mubr.f32.gmra.mrb[0].mxu0 %v461
        %v594 = vpop.f32.mrb[0].mxu0
        %v595 = vadd.f32 0.0, %v594
        %v596 = vpop.f32.mrb[0].mxu0
        %597 = vmatprep.mubr.f32.mxu0 0.0
        %598 = vmatmul.mubr.f32.gmra.mrb[0].mxu0 %v464
        %v599 = vpop.f32.mrb[0].mxu0
        %v600 = vadd.f32 0.0, %v599
        %v601 = vpop.f32.mrb[0].mxu0
        %602 = vmatprep.mubr.f32.mxu0 0.0
        %603 = vmatmul.mubr.f32.gmra.mrb[0].mxu0 %v467
        %v604 = vpop.f32.mrb[0].mxu0
        %v605 = vadd.f32 0.0, %v604
        %v606 = vpop.f32.mrb[0].mxu0
        %607 = vmatprep.mubr.f32.mxu0 0.0
        %608 = vmatmul.mubr.f32.gmra.mrb[0].mxu0 %v470
        %v609 = vpop.f32.mrb[0].mxu0
        %v610 = vadd.f32 0.0, %v609
        %v611 = vpop.f32.mrb[0].mxu0
        %612 = vmatprep.mubr.f32.mxu0 0.0
        %613 = vmatmul.mubr.f32.gmra.mrb[0].mxu0 %v473
        %v614 = vpop.f32.mrb[0].mxu0
        %v615 = vadd.f32 0.0, %v614
        %v616 = vpop.f32.mrb[0].mxu0
        %617 = vmatprep.mubr.f32.mxu0 0.0
        %618 = vmatmul.mubr.f32.gmra.mrb[0].mxu0 %v476
        %v619 = vpop.f32.mrb[0].mxu0
        %v620 = vadd.f32 0.0, %v619
        %v621 = vpop.f32.mrb[0].mxu0
        %622 = vdwg.mxu0
        %623 = vxpose.xlu0.b32.start [1/16] %v545, 128
        %624 = vxpose.xlu0.b32.cont [2/16] %v550, 128
        %625 = vxpose.xlu0.b32.cont [3/16] %v555, 128
        %626 = vxpose.xlu0.b32.cont [4/16] %v560, 128
        %627 = vxpose.xlu0.b32.cont [5/16] %v565, 128
        %628 = vxpose.xlu0.b32.cont [6/16] %v570, 128
        %629 = vxpose.xlu0.b32.cont [7/16] %v575, 128
        %630 = vxpose.xlu0.b32.cont [8/16] %v580, 128
        %631 = vxpose.xlu0.b32.cont [9/16] %v585, 128
        %632 = vxpose.xlu0.b32.cont [10/16] %v590, 128
        %633 = vxpose.xlu0.b32.cont [11/16] %v595, 128
        %634 = vxpose.xlu0.b32.cont [12/16] %v600, 128
        %635 = vxpose.xlu0.b32.cont [13/16] %v605, 128
        %636 = vxpose.xlu0.b32.cont [14/16] %v610, 128
        %637 = vxpose.xlu0.b32.cont [15/16] %v615, 128
        %638 = vxpose.xlu0.b32.end [16/16] %v620, 128
        %v639 = vpop.trf.xlu0
        %v640 = vpop.trf.xlu0
        %v641 = vpop.trf.xlu0
        %v642 = vpop.trf.xlu0
        %v643 = vpop.trf.xlu0
        %v644 = vpop.trf.xlu0
        %v645 = vpop.trf.xlu0
        %v646 = vpop.trf.xlu0
        %v647 = vpop.trf.xlu0
        %v648 = vpop.trf.xlu0
        %v649 = vpop.trf.xlu0
        %v650 = vpop.trf.xlu0
        %v651 = vpop.trf.xlu0
        %v652 = vpop.trf.xlu0
        %v653 = vpop.trf.xlu0
        %v654 = vpop.trf.xlu0
        %v655 = vld [vmem:[%s5] sm:$0xff]
        %v656 = vld [vmem:[%s5 + $0x8] sm:$0xff]
        %v657 = vld [vmem:[#allocation2] sm:$0xff]
        %v658 = vlaneseq
        %v659 = vshrl.u32 %v658, 7
        %v660 = vsub.s32 0, %v659
        %v661 = vrot.slane %v657, %v660
        %663 = vbcast.lane.b32.xlu0 %v661, 256
        %v664 = vpop.permute.xlu0 %663
        %s666 = sor.u32 256, 8
        %667 = vbcast.lane.b32.xlu0 %v661, %s666
        %v668 = vpop.permute.xlu0 %667
        %v669 = vlaneseq
        %v670 = vshrl.u32 %v669, 7
        %v671 = vsub.s32 1, %v670
        %v672 = vrot.slane %v657, %v671
        %674 = vbcast.lane.b32.xlu0 %v672, 256
        %v675 = vpop.permute.xlu0 %674
        %s677 = sor.u32 256, 8
        %678 = vbcast.lane.b32.xlu0 %v672, %s677
        %v679 = vpop.permute.xlu0 %678
        %v680 = vlaneseq
        %v681 = vshrl.u32 %v680, 7
        %v682 = vsub.s32 2, %v681
        %v683 = vrot.slane %v657, %v682
        %685 = vbcast.lane.b32.xlu0 %v683, 256
        %v686 = vpop.permute.xlu0 %685
        %s688 = sor.u32 256, 8
        %689 = vbcast.lane.b32.xlu0 %v683, %s688
        %v690 = vpop.permute.xlu0 %689
        %v691 = vlaneseq
        %v692 = vshrl.u32 %v691, 7
        %v693 = vsub.s32 3, %v692
        %v694 = vrot.slane %v657, %v693
        %696 = vbcast.lane.b32.xlu0 %v694, 256
        %v697 = vpop.permute.xlu0 %696
        %s699 = sor.u32 256, 8
        %700 = vbcast.lane.b32.xlu0 %v694, %s699
        %v701 = vpop.permute.xlu0 %700
        %v702 = vlaneseq
        %v703 = vshrl.u32 %v702, 7
        %v704 = vsub.s32 4, %v703
        %v705 = vrot.slane %v657, %v704
        %707 = vbcast.lane.b32.xlu0 %v705, 256
        %v708 = vpop.permute.xlu0 %707
        %s710 = sor.u32 256, 8
        %711 = vbcast.lane.b32.xlu0 %v705, %s710
        %v712 = vpop.permute.xlu0 %711
        %v713 = vlaneseq
        %v714 = vshrl.u32 %v713, 7
        %v715 = vsub.s32 5, %v714
        %v716 = vrot.slane %v657, %v715
        %718 = vbcast.lane.b32.xlu0 %v716, 256
        %v719 = vpop.permute.xlu0 %718
        %s721 = sor.u32 256, 8
        %722 = vbcast.lane.b32.xlu0 %v716, %s721
        %v723 = vpop.permute.xlu0 %722
        %v724 = vlaneseq
        %v725 = vshrl.u32 %v724, 7
        %v726 = vsub.s32 6, %v725
        %v727 = vrot.slane %v657, %v726
        %729 = vbcast.lane.b32.xlu0 %v727, 256
        %v730 = vpop.permute.xlu0 %729
        %s732 = sor.u32 256, 8
        %733 = vbcast.lane.b32.xlu0 %v727, %s732
        %v734 = vpop.permute.xlu0 %733
        %v735 = vlaneseq
        %v736 = vshrl.u32 %v735, 7
        %v737 = vsub.s32 7, %v736
        %v738 = vrot.slane %v657, %v737
        %740 = vbcast.lane.b32.xlu0 %v738, 256
        %v741 = vpop.permute.xlu0 %740
        %s743 = sor.u32 256, 8
        %744 = vbcast.lane.b32.xlu0 %v738, %s743
        %v745 = vpop.permute.xlu0 %744
        %v746 = vadd.f32 %v664, %v639
        %v747 = vadd.f32 %v668, %v640
        %v748 = vadd.f32 %v675, %v639
        %v749 = vadd.f32 %v679, %v640
        %v750 = vadd.f32 %v686, %v639
        %v751 = vadd.f32 %v690, %v640
        %v752 = vadd.f32 %v697, %v639
        %v753 = vadd.f32 %v701, %v640
        %v754 = vadd.f32 %v708, %v639
        %v755 = vadd.f32 %v712, %v640
        %v756 = vadd.f32 %v719, %v639
        %v757 = vadd.f32 %v723, %v640
        %v758 = vadd.f32 %v730, %v639
        %v759 = vadd.f32 %v734, %v640
        %v760 = vadd.f32 %v741, %v639
        %v761 = vadd.f32 %v745, %v640
        %v762 = vtanh.pop %v746
        %v763 = vtanh.pop %v747
        %v764 = vtanh.pop %v748
        %v765 = vtanh.pop %v749
        %v766 = vtanh.pop %v750
        %v767 = vtanh.pop %v751
        %v768 = vtanh.pop %v752
        %v769 = vtanh.pop %v753
        %v770 = vtanh.pop %v754
        %v771 = vtanh.pop %v755
        %v772 = vtanh.pop %v756
        %v773 = vtanh.pop %v757
        %v774 = vtanh.pop %v758
        %v775 = vtanh.pop %v759
        %v776 = vtanh.pop %v760
        %v777 = vtanh.pop %v761
        %779 = vset.pattern.permute.xlu0 0
        %780 = vperm.xlu0 %779, %v655
        %v781 = vpop.permute.xlu0 %780
        %784 = vset.pattern.permute.xlu0 0
        %785 = vperm.xlu0 %784, %v656
        %v786 = vpop.permute.xlu0 %785
        %v788 = vmul.f32 %v762, %v781
        %v789 = vmul.f32 %v763, %v786
        %v790 = vmul.f32 %v764, %v781
        %v791 = vmul.f32 %v765, %v786
        %v792 = vmul.f32 %v766, %v781
        %v793 = vmul.f32 %v767, %v786
        %v794 = vmul.f32 %v768, %v781
        %v795 = vmul.f32 %v769, %v786
        %v796 = vmul.f32 %v770, %v781
        %v797 = vmul.f32 %v771, %v786
        %v798 = vmul.f32 %v772, %v781
        %v799 = vmul.f32 %v773, %v786
        %v800 = vmul.f32 %v774, %v781
        %v801 = vmul.f32 %v775, %v786
        %v802 = vmul.f32 %v776, %v781
        %v803 = vmul.f32 %v777, %v786
        %v804 = vadd.f32 %v788, %v789
        %v805 = vrot.slane %v804, 4
        %v806 = vadd.f32 %v804, %v805
        %v807 = vrot.slane %v806, 2
        %v808 = vadd.f32 %v806, %v807
        %v809 = vrot.slane %v808, 1
        %v810 = vadd.f32 %v808, %v809
        %v811 = vadd.f32 %v790, %v791
        %v812 = vrot.slane %v811, 4
        %v813 = vadd.f32 %v811, %v812
        %v814 = vrot.slane %v813, 2
        %v815 = vadd.f32 %v813, %v814
        %v816 = vrot.slane %v815, 1
        %v817 = vadd.f32 %v815, %v816
        %v818 = vadd.f32 %v792, %v793
        %v819 = vrot.slane %v818, 4
        %v820 = vadd.f32 %v818, %v819
        %v821 = vrot.slane %v820, 2
        %v822 = vadd.f32 %v820, %v821
        %v823 = vrot.slane %v822, 1
        %v824 = vadd.f32 %v822, %v823
        %v825 = vadd.f32 %v794, %v795
        %v826 = vrot.slane %v825, 4
        %v827 = vadd.f32 %v825, %v826
        %v828 = vrot.slane %v827, 2
        %v829 = vadd.f32 %v827, %v828
        %v830 = vrot.slane %v829, 1
        %v831 = vadd.f32 %v829, %v830
        %v832 = vadd.f32 %v796, %v797
        %v833 = vrot.slane %v832, 4
        %v834 = vadd.f32 %v832, %v833
        %v835 = vrot.slane %v834, 2
        %v836 = vadd.f32 %v834, %v835
        %v837 = vrot.slane %v836, 1
        %v838 = vadd.f32 %v836, %v837
        %v839 = vadd.f32 %v798, %v799
        %v840 = vrot.slane %v839, 4
        %v841 = vadd.f32 %v839, %v840
        %v842 = vrot.slane %v841, 2
        %v843 = vadd.f32 %v841, %v842
        %v844 = vrot.slane %v843, 1
        %v845 = vadd.f32 %v843, %v844
        %v846 = vadd.f32 %v800, %v801
        %v847 = vrot.slane %v846, 4
        %v848 = vadd.f32 %v846, %v847
        %v849 = vrot.slane %v848, 2
        %v850 = vadd.f32 %v848, %v849
        %v851 = vrot.slane %v850, 1
        %v852 = vadd.f32 %v850, %v851
        %v853 = vadd.f32 %v802, %v803
        %v854 = vrot.slane %v853, 4
        %v855 = vadd.f32 %v853, %v854
        %v856 = vrot.slane %v855, 2
        %v857 = vadd.f32 %v855, %v856
        %v858 = vrot.slane %v857, 1
        %v859 = vadd.f32 %v857, %v858
        %vm868 = vcmask 1041409
        %v869 = vsel %vm868, %v817, %v810
        %vm870 = vcmask 1042434
        %v871 = vsel %vm870, %v824, %v869
        %vm872 = vcmask 1043459
        %v873 = vsel %vm872, %v831, %v871
        %vm874 = vcmask 1044484
        %v875 = vsel %vm874, %v838, %v873
        %vm876 = vcmask 1045509
        %v877 = vsel %vm876, %v845, %v875
        %vm878 = vcmask 1046534
        %v879 = vsel %vm878, %v852, %v877
        %vm880 = vcmask 1047559
        %v881 = vsel %vm880, %v859, %v879
        %883 = vst [vmem:[%s299] sm:$0xff] %v881
        %s884 = sand.u32 %s191, 1
        %s885 = scalar_lea.sflag [#allocation4], %s884
        %s886 = sand.u32 %s191, 1
        %s887 = smul.addr %s886, 8
        %s888 = scalar_lea.vmem [#allocation3], %s887
        // Predicated region
        $region49: #{tpu_custom_call.1} parent=43 // pred_check
          %p889 = pneg %p201
        $region50: #{tpu_custom_call.1} parent=43 // pred_check_branch
          %891 = sbr.rel (%p889) target = $region52
        $region51: #{tpu_custom_call.1} parent=43 // pred_region
          %s893 = ssub.s32 128, 128
          %894 = vsyncadd %s885, %s893
          %s895 = sadd.s32 %s27, %s26
          %s896 = sadd.s32 %s895, %s25
          %s897 = smul.addr %s896, 128
          %s898 = scalar_lea.hbm %s6, %s897
          %s900 = sshll.u32 %s888, 4
          %s901 = int_to_ptr.vmem [resolvable:$true] %s900
          %903 = dma.vmem_to_hbm [thread:$0]  %s901, 128, %s898, %s885
        $region52: #{tpu_custom_call.1} parent=43 // pred_fallthru
          _
      $region44: #{tpu_custom_call.1} parent=5 // pred_fallthru
        _
      %p904 = scmp.le.s32.totalorder 2, %s15
      // Predicated region
      $region53: #{tpu_custom_call.1} parent=5 // pred_check
        %p905 = pneg %p904
      $region54: #{tpu_custom_call.1} parent=5 // pred_check_branch
        %907 = sbr.rel (%p905) target = $region56
      $region55: #{tpu_custom_call.1} parent=5 // pred_region
        %s908 = ssub.s32 %s15, 2
        // Predicated region
        $region57: #{tpu_custom_call.1} parent=55 // pred_check
          %p909 = pneg %p207
        $region58: #{tpu_custom_call.1} parent=55 // pred_check_branch
          %911 = sbr.rel (%p909) target = $region60
        $region59: #{tpu_custom_call.1} parent=55 // pred_region
          %s912 = sand.u32 %s192, 1
          %s913 = scalar_lea.sflag [#allocation4], %s912
          %s914 = sand.u32 %s192, 1
          %s915 = smul.addr %s914, 8
          %s916 = scalar_lea.vmem [#allocation3], %s915
          %917 = dma.done %s913, 128
        $region60: #{tpu_custom_call.1} parent=55 // pred_fallthru
          _
      $region56: #{tpu_custom_call.1} parent=5 // pred_fallthru
        _
    $region6: #{tpu_custom_call.1} parent=1 // loop_footer
      %s19 = sadd.s32 1, %s15
    $region7: #{tpu_custom_call.1} parent=1 // loop_footer_branch
      %14 = sbr.rel target = $region3
    $region8: #{tpu_custom_call.1} parent=1 // loop_exit
      _
    %918 = vsyncpa [#allocation4], 1
    %s919 = scalar_lea.sflag [#allocation4], 1
    %920 = vsyncpa %s919, 1

</llo_original>
